<compile_context>
chip_gen: v6e
topology: v6e:2x2x1
jax: 0.10.0
libtpu: 0.0.40
codegen_flags: <defaults>
</compile_context>

<pallas_src>
import math
from functools import lru_cache

import jax
import jax.numpy as jnp
from jax.experimental import pallas as pl
from jax.experimental.pallas import tpu as pltpu

_LANE = 128
_PACK = 8 * _LANE  # one full f32 vreg worth of elements (sublanes * lanes)


def _pe_add_kernel(x_ref, pe_ref, out_ref):
    """x_ref: [1, 1, TE] (input dtype); pe_ref: [1, TE] (output dtype, scale
    pre-folded); out_ref: [1, 1, TE] (output dtype)."""
    out_ref[0] = x_ref[0].astype(out_ref.dtype) + pe_ref[...]


@lru_cache(maxsize=None)
def _scaled_pe_table(max_len, d_model, dtype_name):
    """Sinusoidal table for all max_len positions, pre-multiplied by d_model**-0.5
    and cast to the output dtype.  Cached so sin/cos and the strided scatters run
    once per (max_len, d_model, dtype), not once per call."""
    position = jnp.arange(max_len, dtype=jnp.float32)[:, None]                # [max_len, 1]
    div_term = jnp.exp(jnp.arange(0, d_model, 2, dtype=jnp.float32)
                       * (-math.log(10000.0) / d_model))                      # [ceil(C/2)]
    angles = position * div_term                                              # [max_len, ceil(C/2)]
    pe = jnp.zeros((max_len, d_model), jnp.float32)
    pe = pe.at[:, 0::2].set(jnp.sin(angles))
    pe = pe.at[:, 1::2].set(jnp.cos(angles)[:, : d_model // 2])
    pe = pe * (float(d_model) ** -0.5)
    return pe.astype(jnp.dtype(dtype_name))


def _choose_tile_elems(total, x_itemsize, out_itemsize, n_batch):
    """Pick the flattened-tile size (in elements) from a VMEM byte budget.

    Live footprint ~= 2 * (x_block + pe_block + out_block)  (double-buffered).
    A ~12 MiB budget stays inside every generation's default scoped-VMEM limit
    (16 MiB v5e, 32 MiB v6e/v7x) while keeping tiles large enough for the HBM
    roofline.
    """
    budget_live_bytes = 12 << 20
    per_elem_live = 2 * (x_itemsize + 2 * out_itemsize)
    te = max(_PACK, (budget_live_bytes // per_elem_live) // _PACK * _PACK)
    if te >= total:
        te = total  # single full-extent tile (always a legal block shape)
        if n_batch == 1 and total >= 2 * _PACK:
            # Megacore: keep >= 2 grid steps on a parallel axis so both v7x
            # TensorCores get work even when the batch axis is 1.
            half = (total + 1) // 2
            te = ((half + _PACK - 1) // _PACK) * _PACK
    return te


def positional_encoding(x, *, max_len=1200, xla_fallback_elems=0):
    """x: [N, L, C]  ->  x + d**(-0.5) * pe[:L]  (f32-promoted dtype, like torch)."""
    N, L, C = x.shape
    assert L <= max_len, f"sequence length {L} exceeds max_len={max_len}"

    # torch keeps the PE buffer in f32 and lets the add promote; mirror that.
    out_dtype = jnp.promote_types(x.dtype, jnp.float32)
    pe = _scaled_pe_table(max_len, C, jnp.dtype(out_dtype).name)[:L]          # [L, C]

    total = L * C
    if N * total <= xla_fallback_elems:
        # Tiny shapes: a fused XLA broadcast-add is already at roofline and skips
        # the pallas_call launch / per-step overhead.  Disabled by default.
        return x.astype(out_dtype) + pe[None]

    # Lane-dense layout: PE is batch-independent, so the add stays purely
    # elementwise after flattening (L, C) -> L*C.  The trailing dim is then a
    # large multiple of 128 even when C < 128 -> unmasked, dense vector stores.
    x_flat = x.reshape(N, 1, total)
    pe_flat = pe.reshape(1, total)

    te = _choose_tile_elems(total, x.dtype.itemsize,
                            jnp.dtype(out_dtype).itemsize, N)
    num_t = pl.cdiv(total, te)  # ragged last tile is masked by Pallas

    x_blk = te * x.dtype.itemsize
    o_blk = te * jnp.dtype(out_dtype).itemsize
    live_bytes = 2 * (x_blk + 2 * o_blk)                # double-buffered x, pe, out
    vmem_limit = int(min(48 << 20, max(16 << 20, 2 * live_bytes)))  # v7x-safe cap

    out = pl.pallas_call(
        _pe_add_kernel,
        out_shape=jax.ShapeDtypeStruct((N, 1, total), out_dtype),
        grid_spec=pltpu.PrefetchScalarGridSpec(
            num_scalar_prefetch=0,
            # Batch innermost: the PE tile's block index is constant across it,
            # so Pallas skips the redundant PE DMAs (table streamed once per tile).
            grid=(num_t, N),
            in_specs=[
                pl.BlockSpec((1, 1, te), lambda t, n: (n, 0, t)),   # x
                pl.BlockSpec((1, te), lambda t, n: (0, t)),         # scaled PE table
            ],
            out_specs=pl.BlockSpec((1, 1, te), lambda t, n: (n, 0, t)),
        ),
        compiler_params=pltpu.CompilerParams(
            dimension_semantics=("parallel", "parallel"),
            vmem_limit_bytes=vmem_limit,
        ),
    )(x_flat, pe_flat)
    return out.reshape(N, L, C)


def _reference(x):
    """Pure-JAX mirror of the PyTorch forward (dropout is never applied)."""
    _, L, C = x.shape
    position = jnp.arange(L, dtype=jnp.float32)[:, None]
    div_term = jnp.exp(
        jnp.arange(0, C, 2, dtype=jnp.float32) * (-math.log(10000.0) / C))
    pe = jnp.zeros((L, C), jnp.float32)
    pe = pe.at[:, 0::2].set(jnp.sin(position * div_term))
    pe = pe.at[:, 1::2].set(jnp.cos(position * div_term)[:, : C // 2])
    return x.astype(jnp.float32) + (C ** -0.5) * pe[None, :, :]


if __name__ == "__main__":
    # Small shapes consistent with the module: batch=2, seq len L=16, d_model=32.
    N, L, C = 2, 16, 32
    key = jax.random.PRNGKey(0)
    x = jax.random.normal(key, (N, L, C), jnp.float32)

    out = positional_encoding(x)
    out = jax.block_until_ready(out)

    ref = _reference(x)
    assert out.shape == (N, L, C)
    assert out.dtype == ref.dtype
    assert jnp.allclose(out, ref, atol=1e-6, rtol=1e-6), "mismatch vs reference"

    print("KERNEL_OK")
</pallas_src>

<mosaic_0001>
module attributes {stable_mosaic.version = 11 : i64} {
  func.func @_pe_add_kernel(%arg0: i32, %arg1: i32, %arg2: memref<1x1x512xf32, #tpu.memory_space<vmem>>, %arg3: memref<1x512xf32, #tpu.memory_space<vmem>>, %arg4: memref<1x1x512xf32, #tpu.memory_space<vmem>>) attributes {dimension_semantics = [#tpu.dimension_semantics<parallel>, #tpu.dimension_semantics<parallel>], iteration_bounds = array<i64: 1, 2>, scalar_prefetch = 0 : i64, scratch_operands = 0 : i64, tpu.core_type = #tpu.core_type<tc>, window_params = [{transform_indices = @transform_0, window_bounds = array<i64: 1, 1, 512>}, {transform_indices = @transform_1, window_bounds = array<i64: 1, 512>}, {transform_indices = @transform_2, window_bounds = array<i64: 1, 1, 512>}]} {
    %c0 = arith.constant 0 : index
    %c0_0 = arith.constant 0 : index
    %c0_1 = arith.constant 0 : index
    %0 = vector.load %arg2[%c0, %c0_0, %c0_1] : memref<1x1x512xf32, #tpu.memory_space<vmem>>, vector<1x1x512xf32>
    %1 = vector.shape_cast %0 : vector<1x1x512xf32> to vector<1x512xf32>
    %c0_2 = arith.constant 0 : index
    %c0_3 = arith.constant 0 : index
    %2 = vector.load %arg3[%c0_2, %c0_3] : memref<1x512xf32, #tpu.memory_space<vmem>>, vector<1x512xf32>
    %3 = arith.addf %1, %2 : vector<1x512xf32>
    %c0_4 = arith.constant 0 : index
    %c0_5 = arith.constant 0 : index
    %c0_6 = arith.constant 0 : index
    %4 = vector.load %arg4[%c0_4, %c0_5, %c0_6] : memref<1x1x512xf32, #tpu.memory_space<vmem>>, vector<1x1x512xf32>
    %5 = vector.shape_cast %4 : vector<1x1x512xf32> to vector<1x512xf32>
    %6 = vector.shape_cast %3 : vector<1x512xf32> to vector<1x1x512xf32>
    tpu.vector_store %arg4[%c0_4, %c0_5, %c0_6], %6 {strides = array<i32>} : memref<1x1x512xf32, #tpu.memory_space<vmem>>, vector<1x1x512xf32>,
    return
  }
  func.func @transform_0(%arg0: i32, %arg1: i32) -> (i32, i32, i32) {
    %c0_i32 = arith.constant 0 : i32
    %c0_i32_0 = arith.constant 0 : i32
    return %arg1, %c0_i32, %arg0 : i32, i32, i32
  }
  func.func @transform_1(%arg0: i32, %arg1: i32) -> (i32, i32) {
    %c0_i32 = arith.constant 0 : i32
    %c0_i32_0 = arith.constant 0 : i32
    return %c0_i32, %arg0 : i32, i32
  }
  func.func @transform_2(%arg0: i32, %arg1: i32) -> (i32, i32, i32) {
    %c0_i32 = arith.constant 0 : i32
    %c0_i32_0 = arith.constant 0 : i32
    return %arg1, %c0_i32, %arg0 : i32, i32, i32
  }
}

</mosaic_0001>

<llo_original>
// kernel: tpu_custom_call.1
$region0: #{tpu_custom_call.1}
  #allocation0 [shape = 'u32[]', space=smem, size = 0x4, offset = 0x4, fixed_abs, tag = 'smem constant byte address 0x4 - core index']
  #allocation1 [shape = 'u32[144,128]{1,0:T(1,128)}', space=vmem, size = 0x12000, scoped, tag = 'internal scratch']
  %s0 = inlined_call_operand.hbm [shape: f32[2,1,512], index: 0, kind: input, shape index: {}]
  %s1 = inlined_call_operand.hbm [shape: f32[1,512], index: 1, kind: input, shape index: {}]
  %s2 = inlined_call_operand.hbm [shape: f32[2,1,512], index: 2, kind: output, shape index: {}]
  %s3 = sld [smem:[#allocation0]]
  $region49: #{tpu_custom_call.1} parent=0
    _
  %s5 = ssub.s32 1, %s3
  %s6 = scalar_select 0, %s5, %s3
  $region1: #{tpu_custom_call.1} parent=0
    #allocation2 [shape = 'u8[4096]{0}', space=vmem, size = 0x1000, scoped, tag = 'input window, operand 0']
    #allocation3 [shape = 's32[2]{0}', space=sflag, size = 0x8, scoped, tag = 'scoped memory for tpu_custom_call.1']
    #allocation4 [shape = 's32[2]{0}', space=sflag, size = 0x8, scoped, tag = 'scoped memory for tpu_custom_call.1']
    #allocation5 [shape = 'u8[2048]{0}', space=vmem, size = 0x800, scoped, tag = 'input window, operand 1, single buffered']
    #allocation6 [shape = 's32[1]{0}', space=sflag, size = 0x4, scoped, tag = 'scoped memory for tpu_custom_call.1']
    #allocation7 [shape = 'u8[4096]{0}', space=vmem, size = 0x1000, scoped, tag = 'output window, operand 0']
    %7 = vsyncpa [#allocation3], 0
    %s8 = scalar_lea.sflag [#allocation3], 1
    %9 = vsyncpa %s8, 0
    %10 = vsyncpa [#allocation6], 0
    %11 = vsyncpa [#allocation4], 0
    %s12 = scalar_lea.sflag [#allocation4], 1
    %13 = vsyncpa %s12, 0
    loop: start=0, step=1, limit=4
    $region2: #{tpu_custom_call.1} parent=1 // loop_pre_header
      _
    $region3: #{tpu_custom_call.1} parent=1 // loop_header
      %s15 = sphi 0, %s19
      %p16 = scmp.ge.s32.totalorder %s15, 4
      %s22 = sphi 0, %s34
      %s23 = sphi 0, %s30
      %s24 = sphi 0, %s22
      %s25 = sphi 0, %s23
      %s26 = sphi 0, %s24
      %s27 = sphi 0, %s25
      %s39 = sphi 0, %s41
      %s42 = sphi 0, %s39
      %s43 = sphi 0, %s42
      %s59 = sphi 0, %s43
      %s65 = sphi 0, %s67
      %s68 = sphi 0, %s65
      %s69 = sphi 0, %s68
      %s85 = sphi 0, %s69
      %s93 = sphi 0, %s95
      %s96 = sphi 0, %s93
      %s97 = sphi 0, %s96
      %s113 = sphi 0, %s97
    $region4: #{tpu_custom_call.1} parent=1 // loop_header_branch
      %18 = sbr.rel (%p16) target = $region8
    $region5: #{tpu_custom_call.1} parent=1 // loop_body
      %s20 = ssub.s32 %s15, 1
      %s21 = ssub.s32 %s15, 2
      %s28 = sadd.s32 1, %s23
      %p29 = scmp.ge.s32.totalorder %s28, 2
      %s30 = scalar_select %p29, 0, %s28
      %s31 = sadd.s32 1, %s22
      %s32 = scalar_select %p29, %s31, %s22
      %p33 = scmp.ge.s32.totalorder %s32, 1
      %s34 = scalar_select %p33, 0, %s32
      %s35 = ssub.s32 %s23, %s30
      %s36 = ssub.s32 %s22, %s34
      %s37 = sor.u32 %s35, %s36
      %p38 = scmp.eq.s32.totalorder %s37, 0
      %s40 = sadd.s32 %s39, 1
      %s41 = scalar_select %p38, %s39, %s40
      %p44 = pneg %p38
      %p45 = scmp.eq.s32.totalorder %s15, 1
      %p46 = por %p44, %p45
      %p47 = scmp.ne.s32.totalorder %s39, %s42
      %p48 = scmp.eq.s32.totalorder %s15, 0
      %p49 = por %p47, %p48
      %p50 = scmp.ne.s32.totalorder %s39, %s42
      %p51 = scmp.eq.s32.totalorder %s20, 1
      %p52 = por %p50, %p51
      %p53 = scmp.ne.s32.totalorder %s42, %s43
      %p54 = scmp.eq.s32.totalorder %s20, 0
      %p55 = por %p53, %p54
      %p56 = scmp.ne.s32.totalorder %s42, %s43
      %p57 = scmp.eq.s32.totalorder %s21, 1
      %p58 = por %p56, %p57
      %p60 = scmp.ne.s32.totalorder %s43, %s59
      %p61 = scmp.eq.s32.totalorder %s21, 0
      %p62 = por %p60, %p61
      %s63 = ssub.s32 %s22, %s34
      %p64 = scmp.eq.s32.totalorder %s63, 0
      %s66 = sadd.s32 %s65, 1
      %s67 = scalar_select %p64, %s65, %s66
      %p70 = pneg %p64
      %p71 = scmp.eq.s32.totalorder %s15, 1
      %p72 = por %p70, %p71
      %p73 = scmp.ne.s32.totalorder %s65, %s68
      %p74 = scmp.eq.s32.totalorder %s15, 0
      %p75 = por %p73, %p74
      %p76 = scmp.ne.s32.totalorder %s65, %s68
      %p77 = scmp.eq.s32.totalorder %s20, 1
      %p78 = por %p76, %p77
      %p79 = scmp.ne.s32.totalorder %s68, %s69
      %p80 = scmp.eq.s32.totalorder %s20, 0
      %p81 = por %p79, %p80
      %p82 = scmp.ne.s32.totalorder %s68, %s69
      %p83 = scmp.eq.s32.totalorder %s21, 1
      %p84 = por %p82, %p83
      %p86 = scmp.ne.s32.totalorder %s69, %s85
      %p87 = scmp.eq.s32.totalorder %s21, 0
      %p88 = por %p86, %p87
      %s89 = ssub.s32 %s23, %s30
      %s90 = ssub.s32 %s22, %s34
      %s91 = sor.u32 %s89, %s90
      %p92 = scmp.eq.s32.totalorder %s91, 0
      %s94 = sadd.s32 %s93, 1
      %s95 = scalar_select %p92, %s93, %s94
      %p98 = pneg %p92
      %p99 = scmp.eq.s32.totalorder %s15, 1
      %p100 = por %p98, %p99
      %p101 = scmp.ne.s32.totalorder %s93, %s96
      %p102 = scmp.eq.s32.totalorder %s15, 0
      %p103 = por %p101, %p102
      %p104 = scmp.ne.s32.totalorder %s93, %s96
      %p105 = scmp.eq.s32.totalorder %s20, 1
      %p106 = por %p104, %p105
      %p107 = scmp.ne.s32.totalorder %s96, %s97
      %p108 = scmp.eq.s32.totalorder %s20, 0
      %p109 = por %p107, %p108
      %p110 = scmp.ne.s32.totalorder %s96, %s97
      %p111 = scmp.eq.s32.totalorder %s21, 1
      %p112 = por %p110, %p111
      %p114 = scmp.ne.s32.totalorder %s97, %s113
      %p115 = scmp.eq.s32.totalorder %s21, 0
      %p116 = por %p114, %p115
      %p117 = scmp.le.s32.totalorder 1, %s15
      %p118 = scmp.lt.s32.totalorder %s15, 3
      %p119 = pnand %p117, %p118
      %p120 = pneg %p119
      // Predicated region
      $region9: #{tpu_custom_call.1} parent=5 // pred_check
        _
      $region10: #{tpu_custom_call.1} parent=5 // pred_check_branch
        %122 = sbr.rel (%p119) target = $region12
      $region11: #{tpu_custom_call.1} parent=5 // pred_region
        %s123 = ssub.s32 %s15, 1
        // Predicated region
        $region13: #{tpu_custom_call.1} parent=11 // pred_check
          %p124 = pneg %p81
        $region14: #{tpu_custom_call.1} parent=11 // pred_check_branch
          %126 = sbr.rel (%p124) target = $region16
        $region15: #{tpu_custom_call.1} parent=11 // pred_region
          %s127 = smul.u32 4, %s24
          %s129 = ssub.s32 64, 64
          %130 = vsyncadd [#allocation6], %s129
          %s131 = smul.addr %s127, 16
          %s132 = scalar_lea.hbm %s1, %s131
          %s134 = sshll.u32 [#allocation5], 4
          %s135 = int_to_ptr.vmem [resolvable:$true] %s134
          %137 = dma.hbm_to_vmem [thread:$0]  %s132, 64, %s135, [#allocation6]
        $region16: #{tpu_custom_call.1} parent=11 // pred_fallthru
          _
      $region12: #{tpu_custom_call.1} parent=5 // pred_fallthru
        _
      %p138 = scmp.lt.s32.totalorder %s15, 2
      // Predicated region
      $region17: #{tpu_custom_call.1} parent=5 // pred_check
        %p139 = pneg %p138
      $region18: #{tpu_custom_call.1} parent=5 // pred_check_branch
        %141 = sbr.rel (%p139) target = $region20
      $region19: #{tpu_custom_call.1} parent=5 // pred_region
        // Predicated region
        $region21: #{tpu_custom_call.1} parent=19 // pred_check
          %p142 = pneg %p49
        $region22: #{tpu_custom_call.1} parent=19 // pred_check_branch
          %144 = sbr.rel (%p142) target = $region24
        $region23: #{tpu_custom_call.1} parent=19 // pred_region
          %s145 = sand.u32 %s39, 1
          %s146 = scalar_lea.sflag [#allocation3], %s145
          %s147 = sand.u32 %s39, 1
          %s148 = smul.addr %s147, 4
          %s149 = scalar_lea.vmem [#allocation2], %s148
          %s150 = smul.u32 4, %s22
          %s152 = ssub.s32 64, 64
          %153 = vsyncadd %s146, %s152
          %s154 = smul.addr %s23, 4
          %s155 = sadd.s32 %s150, %s154
          %s156 = smul.addr %s155, 16
          %s157 = scalar_lea.hbm %s0, %s156
          %s159 = sshll.u32 %s149, 4
          %s160 = int_to_ptr.vmem [resolvable:$true] %s159
          %162 = dma.hbm_to_vmem [thread:$0]  %s157, 64, %s160, %s146
        $region24: #{tpu_custom_call.1} parent=19 // pred_fallthru
          _
      $region20: #{tpu_custom_call.1} parent=5 // pred_fallthru
        _
      %p163 = scmp.le.s32.totalorder 1, %s15
      %p164 = scmp.lt.s32.totalorder %s15, 3
      %p165 = pnand %p163, %p164
      %p166 = pneg %p165
      // Predicated region
      $region25: #{tpu_custom_call.1} parent=5 // pred_check
        _
      $region26: #{tpu_custom_call.1} parent=5 // pred_check_branch
        %168 = sbr.rel (%p165) target = $region28
      $region27: #{tpu_custom_call.1} parent=5 // pred_region
        %s169 = ssub.s32 %s15, 1
        %s170 = sand.u32 %s42, 1
        %s171 = scalar_lea.sflag [#allocation3], %s170
        %s172 = sand.u32 %s42, 1
        %s173 = smul.addr %s172, 4
        %s174 = scalar_lea.vmem [#allocation2], %s173
        // Predicated region
        $region29: #{tpu_custom_call.1} parent=27 // pred_check
          %p175 = pneg %p55
        $region30: #{tpu_custom_call.1} parent=27 // pred_check_branch
          %177 = sbr.rel (%p175) target = $region32
        $region31: #{tpu_custom_call.1} parent=27 // pred_region
          %178 = dma.done %s171, 64
        $region32: #{tpu_custom_call.1} parent=27 // pred_fallthru
          _
        // Predicated region
        $region33: #{tpu_custom_call.1} parent=27 // pred_check
          %p179 = pneg %p81
        $region34: #{tpu_custom_call.1} parent=27 // pred_check_branch
          %181 = sbr.rel (%p179) target = $region36
        $region35: #{tpu_custom_call.1} parent=27 // pred_region
          %182 = dma.done [#allocation6], 64
        $region36: #{tpu_custom_call.1} parent=27 // pred_fallthru
          _
        %s183 = sand.u32 %s42, 1
        %s184 = scalar_lea.sflag [#allocation3], %s183
        %s185 = sand.u32 %s42, 1
        %s186 = smul.addr %s185, 4
        %s187 = scalar_lea.vmem [#allocation2], %s186
        %p188 = pneg %p55
        %p189 = pneg %p52
        %p190 = pneg %p81
        %p191 = pneg %p78
        %p192 = pneg %p109
        %p193 = pneg %p106
        %s194 = sand.u32 %s96, 1
        %s195 = scalar_lea.sflag [#allocation4], %s194
        %s196 = sand.u32 %s96, 1
        %s197 = smul.addr %s196, 4
        %s198 = scalar_lea.vmem [#allocation7], %s197
        %s199 = smul.u32 4, %s24
        %s200 = smul.u32 4, %s24
        %s201 = smul.u32 4, %s24
        %v202 = vld [vmem:[%s174] sm:$0xf]
        %v203 = vld [vmem:[#allocation5] sm:$0xf]
        %v204 = vadd.f32 %v202, %v203
        %v205 = vlaneseq
        %vm206 = vcmp.ge.s32.totalorder %v205, 0
        %vm207 = vcmp.lt.s32.totalorder %v205, 512
        %vm208 = vmand %vm206, %vm207
        %209 = vst.msk [vmem:[%s198] sm:$0xf] %vm208, %v204
        %s210 = sand.u32 %s96, 1
        %s211 = scalar_lea.sflag [#allocation4], %s210
        %s212 = sand.u32 %s96, 1
        %s213 = smul.addr %s212, 4
        %s214 = scalar_lea.vmem [#allocation7], %s213
        // Predicated region
        $region37: #{tpu_custom_call.1} parent=27 // pred_check
          %p215 = pneg %p106
        $region38: #{tpu_custom_call.1} parent=27 // pred_check_branch
          %217 = sbr.rel (%p215) target = $region40
        $region39: #{tpu_custom_call.1} parent=27 // pred_region
          %s218 = smul.u32 4, %s24
          %s220 = ssub.s32 64, 64
          %221 = vsyncadd %s211, %s220
          %s222 = smul.addr %s25, 4
          %s223 = sadd.s32 %s218, %s222
          %s224 = smul.addr %s223, 16
          %s225 = scalar_lea.hbm %s2, %s224
          %s227 = sshll.u32 %s214, 4
          %s228 = int_to_ptr.vmem [resolvable:$true] %s227
          %230 = dma.vmem_to_hbm [thread:$0]  %s228, 64, %s225, %s211
        $region40: #{tpu_custom_call.1} parent=27 // pred_fallthru
          _
      $region28: #{tpu_custom_call.1} parent=5 // pred_fallthru
        _
      %p231 = scmp.le.s32.totalorder 2, %s15
      // Predicated region
      $region41: #{tpu_custom_call.1} parent=5 // pred_check
        %p232 = pneg %p231
      $region42: #{tpu_custom_call.1} parent=5 // pred_check_branch
        %234 = sbr.rel (%p232) target = $region44
      $region43: #{tpu_custom_call.1} parent=5 // pred_region
        %s235 = ssub.s32 %s15, 2
        // Predicated region
        $region45: #{tpu_custom_call.1} parent=43 // pred_check
          %p236 = pneg %p112
        $region46: #{tpu_custom_call.1} parent=43 // pred_check_branch
          %238 = sbr.rel (%p236) target = $region48
        $region47: #{tpu_custom_call.1} parent=43 // pred_region
          %s239 = sand.u32 %s97, 1
          %s240 = scalar_lea.sflag [#allocation4], %s239
          %s241 = sand.u32 %s97, 1
          %s242 = smul.addr %s241, 4
          %s243 = scalar_lea.vmem [#allocation7], %s242
          %244 = dma.done %s240, 64
        $region48: #{tpu_custom_call.1} parent=43 // pred_fallthru
          _
      $region44: #{tpu_custom_call.1} parent=5 // pred_fallthru
        _
    $region6: #{tpu_custom_call.1} parent=1 // loop_footer
      %s19 = sadd.s32 1, %s15
    $region7: #{tpu_custom_call.1} parent=1 // loop_footer_branch
      %14 = sbr.rel target = $region3
    $region8: #{tpu_custom_call.1} parent=1 // loop_exit
      _
    %245 = vsyncpa [#allocation3], 1
    %s246 = scalar_lea.sflag [#allocation3], 1
    %247 = vsyncpa %s246, 1
    %248 = vsyncpa [#allocation6], 1
    %249 = vsyncpa [#allocation4], 1
    %s250 = scalar_lea.sflag [#allocation4], 1
    %251 = vsyncpa %s250, 1

</llo_original>
